<compile_context>
chip_gen: v7x
topology: tpu7x:2x2x1
jax: 0.10.0
libtpu: 0.0.40
codegen_flags: <defaults>
</compile_context>

<pallas_src>
import functools
import math

import jax
import jax.numpy as jnp
from jax.experimental import pallas as pl
from jax.experimental.pallas import tpu as pltpu

_LANE = 128
_SUBLANE = 8


def _round_up(x, m):
    return ((x + m - 1) // m) * m


# ----------------------------------------------------------------------------
# In-kernel helpers
# ----------------------------------------------------------------------------
def _erf(x):
    # Abramowitz & Stegun 7.1.26 rational approximation, |abs err| < 1.5e-7
    # (f32-level accuracy; only uses ops with guaranteed Mosaic lowerings).
    a1, a2, a3, a4, a5 = 0.254829592, -0.284496736, 1.421413741, -1.453152027, 1.061405429
    p = 0.3275911
    ax = jnp.abs(x)
    t = 1.0 / (1.0 + p * ax)
    poly = ((((a5 * t + a4) * t + a3) * t + a2) * t + a1) * t
    y = 1.0 - poly * jnp.exp(-ax * ax)
    return jnp.where(x < 0.0, -y, y)


def _gelu_exact(x):
    # nn.GELU (exact, erf-based), matching PyTorch default up to the erf approximation.
    return 0.5 * x * (1.0 + _erf(x * (1.0 / math.sqrt(2.0))))


# ----------------------------------------------------------------------------
# Tiled matmul (+ fused bias / GELU / residual epilogue)
# ----------------------------------------------------------------------------
def _make_matmul_kernel(activation, has_residual):
    def kernel(a_ref, w_ref, b_ref, *rest):
        if has_residual:
            r_ref, o_ref, acc_ref = rest
        else:
            o_ref, acc_ref = rest
            r_ref = None
        k = pl.program_id(2)

        @pl.when(k == 0)
        def _():
            acc_ref[...] = jnp.zeros_like(acc_ref)

        # bf16 MXU inputs, f32 accumulation.
        acc_ref[...] += jnp.dot(
            a_ref[...].astype(jnp.bfloat16),
            w_ref[...].astype(jnp.bfloat16),
            preferred_element_type=jnp.float32,
        )

        @pl.when(k == pl.num_programs(2) - 1)
        def _():
            out = acc_ref[...] + b_ref[...]
            if r_ref is not None:
                out = out + r_ref[...]
            if activation == "gelu":
                out = _gelu_exact(out)
            o_ref[...] = out.astype(o_ref.dtype)

    return kernel


def matmul_bias(a, w, b, activation=None, residual=None):
    """(M, K) @ (K, N) + b[None, :] (+ residual) (+ exact GELU), tiled for the MXU."""
    M, K = a.shape
    K2, N = w.shape
    assert K == K2

    # Tile sizes: conservative VMEM budget (~3 MiB of live tiles), MXU-aligned.
    tm = 256 if M > 256 else _round_up(M, _SUBLANE)
    Mp = _round_up(M, tm)
    tn = 256 if N > 256 else _round_up(N, _LANE)
    Np = _round_up(N, tn)
    tk = 512 if K > 512 else _round_up(K, _LANE)
    Kp = _round_up(K, tk)

    a_p = a if (Mp == M and Kp == K) else jnp.pad(a, ((0, Mp - M), (0, Kp - K)))
    w_p = w if (Kp == K and Np == N) else jnp.pad(w, ((0, Kp - K), (0, Np - N)))
    b_p = (b if Np == N else jnp.pad(b, ((0, Np - N),))).reshape(1, Np)

    in_specs = [
        pl.BlockSpec((tm, tk), lambda i, j, k: (i, k)),
        pl.BlockSpec((tk, tn), lambda i, j, k: (k, j)),
        pl.BlockSpec((1, tn), lambda i, j, k: (0, j)),
    ]
    args = [a_p, w_p, b_p]
    if residual is not None:
        r_p = residual if (Mp == M and Np == N) else jnp.pad(
            residual, ((0, Mp - M), (0, Np - N)))
        in_specs.append(pl.BlockSpec((tm, tn), lambda i, j, k: (i, j)))
        args.append(r_p)

    out = pl.pallas_call(
        _make_matmul_kernel(activation, residual is not None),
        out_shape=jax.ShapeDtypeStruct((Mp, Np), jnp.float32),
        grid=(Mp // tm, Np // tn, Kp // tk),
        in_specs=in_specs,
        out_specs=pl.BlockSpec((tm, tn), lambda i, j, k: (i, j)),
        scratch_shapes=[pltpu.VMEM((tm, tn), jnp.float32)],
        compiler_params=pltpu.CompilerParams(
            dimension_semantics=("parallel", "parallel", "arbitrary"),
            vmem_limit_bytes=32 * 1024 * 1024,
        ),
    )(*args)
    if Mp != M or Np != N:
        out = out[:M, :N]
    return out


# ----------------------------------------------------------------------------
# LayerNorm (tiled over rows)
# ----------------------------------------------------------------------------
def _layernorm_kernel(x_ref, g_ref, b_ref, o_ref, *, eps):
    x = x_ref[...].astype(jnp.float32)
    mean = jnp.mean(x, axis=-1, keepdims=True)
    xc = x - mean
    var = jnp.mean(xc * xc, axis=-1, keepdims=True)
    y = xc * jax.lax.rsqrt(var + eps)
    o_ref[...] = (y * g_ref[...] + b_ref[...]).astype(o_ref.dtype)


def layernorm(x, gamma, beta, eps=1e-6):
    M, C = x.shape
    tm = 512 if M > 512 else _round_up(M, _SUBLANE)
    Mp = _round_up(M, tm)
    x_p = x if Mp == M else jnp.pad(x, ((0, Mp - M), (0, 0)))
    out = pl.pallas_call(
        functools.partial(_layernorm_kernel, eps=eps),
        out_shape=jax.ShapeDtypeStruct((Mp, C), jnp.float32),
        grid=(Mp // tm,),
        in_specs=[
            pl.BlockSpec((tm, C), lambda i: (i, 0)),
            pl.BlockSpec((1, C), lambda i: (0, 0)),
            pl.BlockSpec((1, C), lambda i: (0, 0)),
        ],
        out_specs=pl.BlockSpec((tm, C), lambda i: (i, 0)),
        compiler_params=pltpu.CompilerParams(dimension_semantics=("parallel",)),
    )(x_p, gamma.reshape(1, C), beta.reshape(1, C))
    return out[:M] if Mp != M else out


# ----------------------------------------------------------------------------
# Attention: one batch sample (all heads) per grid step, lane-dense (S, C) output
# ----------------------------------------------------------------------------
def _attention_kernel(q_ref, k_ref, v_ref, o_ref, *, scale, num_heads, head_dim):
    outs = []
    for h in range(num_heads):
        lo = h * head_dim
        hi = lo + head_dim
        qh = q_ref[0, :, lo:hi].astype(jnp.float32)      # (S, hd)
        kh = k_ref[0, :, lo:hi].astype(jnp.float32)
        vh = v_ref[0, :, lo:hi].astype(jnp.float32)
        s = jax.lax.dot_general(qh, kh, (((1,), (1,)), ((), ())),
                                preferred_element_type=jnp.float32) * scale
        s = s - jnp.max(s, axis=-1, keepdims=True)
        p = jnp.exp(s)
        p = p * pl.reciprocal(jnp.sum(p, axis=-1, keepdims=True), approx=True)
        outs.append(jnp.dot(p, vh, preferred_element_type=jnp.float32))
    # Concatenate heads along channels -> single lane-dense store.
    o_ref[...] = jnp.concatenate(outs, axis=-1)[None].astype(o_ref.dtype)


def attention(q, k, v, scale, num_heads, head_dim):
    """q, k, v: (B, S, C) with heads laid out contiguously along C (timm qkv layout)."""
    B, S, C = q.shape
    kern = functools.partial(_attention_kernel, scale=scale,
                             num_heads=num_heads, head_dim=head_dim)
    spec = pl.BlockSpec((1, S, C), lambda i: (i, 0, 0))
    return pl.pallas_call(
        kern,
        out_shape=jax.ShapeDtypeStruct((B, S, C), jnp.float32),
        grid=(B,),
        in_specs=[spec, spec, spec],
        out_specs=spec,
        compiler_params=pltpu.CompilerParams(dimension_semantics=("parallel",)),
    )(q, k, v)


# ----------------------------------------------------------------------------
# MaxPool2d(3, 2, 1): single-pass Pallas kernel (reads the feature map once)
# ----------------------------------------------------------------------------
def _maxpool3x3s2_kernel(x_ref, o_ref):
    _, Hp, Wp, C = x_ref.shape          # Hp = 2*Ho + 1, Wp = 2*Wo + 1 (padded with -inf)
    Ho = o_ref.shape[1]
    x = x_ref[0]                         # (Hp, Wp, C)
    # Row (H) direction: max over rows {2h, 2h+1, 2h+2} via a free major-dim reshape.
    a = x[0:2 * Ho].reshape(Ho, 2, Wp, C)
    b = x[1:2 * Ho + 1].reshape(Ho, 2, Wp, C)
    rowmax = jnp.maximum(jnp.maximum(a[:, 0], a[:, 1]),
                         jnp.maximum(b[:, 0], b[:, 1]))          # (Ho, Wp, C)
    # Column (W) direction: 3-wide window max at every column start (unit-stride slices).
    colmax = jnp.maximum(jnp.maximum(rowmax[:, 0:Wp - 2], rowmax[:, 1:Wp - 1]),
                         rowmax[:, 2:Wp])                         # (Ho, Wp-2, C)
    o_ref[0] = colmax


def maxpool_3x3_s2_p1(x):
    """x: (B, H, W, C) -> (B, Ho, Wo, C), equivalent to nn.MaxPool2d(3, 2, 1)."""
    B, H, W, C = x.shape
    Ho = (H + 2 - 3) // 2 + 1
    Wo = (W + 2 - 3) // 2 + 1
    Hp, Wp = 2 * Ho + 1, 2 * Wo + 1
    xp = jnp.pad(x, ((0, 0), (1, Hp - H - 1), (1, Wp - W - 1), (0, 0)),
                 constant_values=-jnp.inf)
    out = pl.pallas_call(
        _maxpool3x3s2_kernel,
        out_shape=jax.ShapeDtypeStruct((B, Ho, Wp - 2, C), jnp.float32),
        grid=(B,),
        in_specs=[pl.BlockSpec((1, Hp, Wp, C), lambda i: (i, 0, 0, 0))],
        out_specs=pl.BlockSpec((1, Ho, Wp - 2, C), lambda i: (i, 0, 0, 0)),
        compiler_params=pltpu.CompilerParams(dimension_semantics=("parallel",)),
    )(xp)
    # TODO(synk): the final stride-2 column pick is left to XLA (pure indexing glue);
    # a fully strided in-kernel store would save one small re-read of the pooled map.
    return out[:, :, ::2, :]


# ----------------------------------------------------------------------------
# JAX glue (indexing / reshapes only)
# ----------------------------------------------------------------------------
def _im2col(x, ps, stride):
    """x: (B, H, W, C) -> patches (B*Ho*Wo, C*ps*ps) matching the synthetic weight layout."""
    # TODO(synk): im2col patch extraction is pure indexing glue and stays in XLA.
    B, H, W, C = x.shape
    Ho = (H - ps) // stride + 1
    Wo = (W - ps) // stride + 1
    cols = []
    for ki in range(ps):
        for kj in range(ps):
            cols.append(x[:, ki: ki + stride * (Ho - 1) + 1: stride,
                             kj: kj + stride * (Wo - 1) + 1: stride, :])
    patches = jnp.stack(cols, axis=-1)                 # (B, Ho, Wo, C, ps*ps)
    return patches.reshape(B * Ho * Wo, C * ps * ps), Ho, Wo


# ----------------------------------------------------------------------------
# Module forward passes
# ----------------------------------------------------------------------------
def transformer_block_forward(tokens, p, num_heads):
    """timm-style ViT block: x += Attn(LN(x)); x += MLP(LN(x))  (all drops = identity)."""
    B, S, C = tokens.shape
    hd = C // num_heads
    xf = tokens.reshape(B * S, C)

    # --- attention branch (residual fused into the proj matmul epilogue) ---
    h = layernorm(xf, p["norm1_w"], p["norm1_b"])
    qkv = matmul_bias(h, p["qkv_w"], p["qkv_b"]).reshape(B, S, 3 * C)
    q, k, v = qkv[..., :C], qkv[..., C:2 * C], qkv[..., 2 * C:]
    o = attention(q, k, v, hd ** -0.5, num_heads, hd).reshape(B * S, C)
    xf = matmul_bias(o, p["proj_w"], p["proj_b"], residual=xf)

    # --- mlp branch (residual fused into the fc2 matmul epilogue) ---
    h = layernorm(xf, p["norm2_w"], p["norm2_b"])
    h = matmul_bias(h, p["fc1_w"], p["fc1_b"], activation="gelu")
    xf = matmul_bias(h, p["fc2_w"], p["fc2_b"], residual=xf)
    return xf.reshape(B, S, C)


def transformer_stage(x, cls_tokens, stage_params, num_heads):
    """x: (B, H, W, C), cls_tokens: (B, T, C)  ==  Transformer.forward"""
    B, H, W, C = x.shape
    T = cls_tokens.shape[1]
    tokens = jnp.concatenate([cls_tokens, x.reshape(B, H * W, C)], axis=1)
    for blk in stage_params["blocks"]:
        tokens = transformer_block_forward(tokens, blk, num_heads)
    cls_tokens = tokens[:, :T]
    x = tokens[:, T:].reshape(B, H, W, C)
    return x, cls_tokens


def conv_head_pooling_forward(x, cls_token, p):
    """conv_head_pooling.forward (channel-last; 1x1 convs == matmuls over channels).

    The reference computes min-pool / avg-pool results that are never used (only the
    max-pool output feeds conv1/conv2), so those dead paths are skipped entirely.
    """
    B, H, W, Cin = x.shape
    mx = maxpool_3x3_s2_p1(x)                        # (B, Ho, Wo, Cin)
    _, Ho, Wo, _ = mx.shape
    mx_f = mx.reshape(B * Ho * Wo, Cin)

    max_2 = matmul_bias(mx_f, p["conv1_w"], p["conv1_b"])
    avg_2 = matmul_bias(mx_f, p["conv2_w"], p["conv2_b"])
    cat = jnp.concatenate([avg_2, max_2], axis=-1)    # channel concat (== dim=1 in NCHW)
    y = matmul_bias(cat, p["conv3_w"], p["conv3_b"], residual=max_2)   # conv3(cat)+max_2
    Cout = y.shape[-1]
    x_out = y.reshape(B, Ho, Wo, Cout)

    Bc, T, _ = cls_token.shape
    cls_out = matmul_bias(cls_token.reshape(Bc * T, Cin),
                          p["fc_w"], p["fc_b"]).reshape(Bc, T, Cout)
    return x_out, cls_out


def pooling_transformer_forward(x_nchw, params, cfg):
    B = x_nchw.shape[0]
    x = jnp.transpose(x_nchw, (0, 2, 3, 1)).astype(jnp.float32)   # NCHW -> NHWC

    # Patch embedding (Conv2d, padding=0) via im2col + tiled matmul; the pos-embed add
    # (pos_drop has p=0 -> identity) is fused into the matmul epilogue as a residual.
    patches, Ho, Wo = _im2col(x, cfg["patch_size"], cfg["stride"])
    C0 = params["patch_w"].shape[1]
    pos = jnp.broadcast_to(params["pos_embed"].reshape(1, Ho * Wo, C0),
                           (B, Ho * Wo, C0)).reshape(B * Ho * Wo, C0)
    x = matmul_bias(patches, params["patch_w"], params["patch_b"],
                    residual=pos).reshape(B, Ho, Wo, C0)
    cls = jnp.broadcast_to(params["cls_token"], (B, 1, C0))

    # Matches the reference exactly: loop only over the pools (last stage never runs).
    for stage in range(len(params["pools"])):
        x, cls = transformer_stage(x, cls, params["stages"][stage], cfg["heads"][stage])
        x, cls = conv_head_pooling_forward(x, cls, params["pools"][stage])

    x_out = jnp.transpose(x, (0, 3, 1, 2))   # back to NCHW, like the PyTorch module
    return x_out, cls


# ----------------------------------------------------------------------------
# Deterministic parameter initialization (synthetic; shapes follow __init__)
# ----------------------------------------------------------------------------
def init_params(key, cfg):
    ps, stride, in_chans = cfg["patch_size"], cfg["stride"], cfg["in_chans"]
    base_dims, heads, depth = cfg["base_dims"], cfg["heads"], cfg["depth"]
    width = math.floor((cfg["image_size"] - ps) / stride + 1)
    embed0 = base_dims[0] * heads[0]

    keys = iter(jax.random.split(key, 256))

    def w(shape, std=0.02):
        return (std * jax.random.normal(next(keys), shape)).astype(jnp.float32)

    params = {
        "pos_embed": w((1, width, width, embed0)),     # stored channel-last
        "cls_token": w((1, 1, embed0)),
        "patch_w": w((in_chans * ps * ps, embed0)),    # (Cin*kh*kw, Cout) matmul layout
        "patch_b": w((embed0,)),
        "stages": [],
        "pools": [],
    }
    for s in range(len(depth)):
        dim = base_dims[s] * heads[s]
        hidden = int(dim * cfg["mlp_ratio"])
        blocks = []
        for _ in range(depth[s]):
            blocks.append({
                # LayerNorms init per _init_weights: weight=1, bias=0
                "norm1_w": jnp.ones((dim,), jnp.float32), "norm1_b": jnp.zeros((dim,), jnp.float32),
                "qkv_w": w((dim, 3 * dim)), "qkv_b": w((3 * dim,)),
                "proj_w": w((dim, dim)), "proj_b": w((dim,)),
                "norm2_w": jnp.ones((dim,), jnp.float32), "norm2_b": jnp.zeros((dim,), jnp.float32),
                "fc1_w": w((dim, hidden)), "fc1_b": w((hidden,)),
                "fc2_w": w((hidden, dim)), "fc2_b": w((dim,)),
            })
        params["stages"].append({"blocks": blocks})
        if s < len(heads) - 1:
            cin = base_dims[s] * heads[s]
            cout = base_dims[s + 1] * heads[s + 1]
            params["pools"].append({
                "conv1_w": w((cin, cout)), "conv1_b": w((cout,)),
                "conv2_w": w((cin, cout)), "conv2_b": w((cout,)),
                "conv3_w": w((2 * cout, cout)), "conv3_b": w((cout,)),
                "fc_w": w((cin, cout)), "fc_b": w((cout,)),
            })
    # The final LayerNorm / classification head exist in __init__ but are never used by
    # the given forward, so they are intentionally not created here.
    return params


# ----------------------------------------------------------------------------
if __name__ == "__main__":
    cfg = dict(
        image_size=16, patch_size=4, stride=4,
        base_dims=[16, 16], heads=[2, 4], depth=[1, 1],
        mlp_ratio=2.0, in_chans=3,
    )
    key = jax.random.PRNGKey(0)
    pkey, xkey = jax.random.split(key)
    params = init_params(pkey, cfg)

    x = jax.random.normal(
        xkey, (2, cfg["in_chans"], cfg["image_size"], cfg["image_size"]), jnp.float32)

    feat, cls_tok = pooling_transformer_forward(x, params, cfg)
    feat = jax.block_until_ready(feat)
    cls_tok = jax.block_until_ready(cls_tok)

    assert feat.shape == (2, 64, 2, 2), feat.shape      # (B, C_stage1, H/8, W/8) in NCHW
    assert cls_tok.shape == (2, 1, 64), cls_tok.shape
    assert bool(jnp.isfinite(feat).all()) and bool(jnp.isfinite(cls_tok).all())
    print("KERNEL_OK")
</pallas_src>

<mosaic_0001>
module attributes {stable_mosaic.version = 11 : i64} {
  func.func @kernel(%arg0: i32, %arg1: i32, %arg2: i32, %arg3: memref<32x128xf32, #tpu.memory_space<vmem>>, %arg4: memref<128x128xf32, #tpu.memory_space<vmem>>, %arg5: memref<1x128xf32, #tpu.memory_space<vmem>>, %arg6: memref<32x128xf32, #tpu.memory_space<vmem>>, %arg7: memref<32x128xf32, #tpu.memory_space<vmem>>, %arg8: memref<32x128xf32, #tpu.memory_space<vmem>>) attributes {dimension_semantics = [#tpu.dimension_semantics<parallel>, #tpu.dimension_semantics<parallel>, #tpu.dimension_semantics<arbitrary>], iteration_bounds = array<i64: 1, 1, 1>, scalar_prefetch = 0 : i64, scratch_operands = 1 : i64, tpu.core_type = #tpu.core_type<tc>, window_params = [{transform_indices = @transform_0, window_bounds = array<i64: 32, 128>}, {transform_indices = @transform_1, window_bounds = array<i64: 128, 128>}, {transform_indices = @transform_2, window_bounds = array<i64: 1, 128>}, {transform_indices = @transform_3, window_bounds = array<i64: 32, 128>}, {transform_indices = @transform_4, window_bounds = array<i64: 32, 128>}]} {
    %c0_i32 = arith.constant 0 : i32
    %0 = arith.cmpi eq, %arg2, %c0_i32 : i32
    %1 = arith.extui %0 : i1 to i32
    %c0_i32_0 = arith.constant 0 : i32
    %2 = arith.cmpi ne, %1, %c0_i32_0 : i32
    scf.if %2 {
      %cst_10 = arith.constant 0.000000e+00 : f32
      %14 = vector.broadcast %cst_10 : f32 to vector<32x128xf32>
      %c0_11 = arith.constant 0 : index
      %c0_12 = arith.constant 0 : index
      %15 = vector.load %arg8[%c0_11, %c0_12] : memref<32x128xf32, #tpu.memory_space<vmem>>, vector<32x128xf32>
      tpu.vector_store %arg8[%c0_11, %c0_12], %14 {strides = array<i32>} : memref<32x128xf32, #tpu.memory_space<vmem>>, vector<32x128xf32>,
    } else {
    }
    %c0 = arith.constant 0 : index
    %c0_1 = arith.constant 0 : index
    %3 = vector.load %arg8[%c0, %c0_1] : memref<32x128xf32, #tpu.memory_space<vmem>>, vector<32x128xf32>
    %c0_2 = arith.constant 0 : index
    %c0_3 = arith.constant 0 : index
    %4 = vector.load %arg3[%c0_2, %c0_3] : memref<32x128xf32, #tpu.memory_space<vmem>>, vector<32x128xf32>
    %5 = arith.truncf %4 : vector<32x128xf32> to vector<32x128xbf16>
    %c0_4 = arith.constant 0 : index
    %c0_5 = arith.constant 0 : index
    %6 = vector.load %arg4[%c0_4, %c0_5] : memref<128x128xf32, #tpu.memory_space<vmem>>, vector<128x128xf32>
    %7 = arith.truncf %6 : vector<128x128xf32> to vector<128x128xbf16>
    %cst = arith.constant dense<0.000000e+00> : vector<32x128xf32>
    %8 = tpu.matmul %5, %7, %cst {dimension_numbers = #tpu.dot_dimension_numbers<[1], [0], [0], [1], [0, 0, 1, 1], [], []>} : vector<32x128xbf16>, vector<128x128xbf16>, vector<32x128xf32> -> vector<32x128xf32>
    %9 = arith.addf %3, %8 : vector<32x128xf32>
    %c0_6 = arith.constant 0 : index
    %c0_7 = arith.constant 0 : index
    %10 = vector.load %arg8[%c0_6, %c0_7] : memref<32x128xf32, #tpu.memory_space<vmem>>, vector<32x128xf32>
    tpu.vector_store %arg8[%c0_6, %c0_7], %9 {strides = array<i32>} : memref<32x128xf32, #tpu.memory_space<vmem>>, vector<32x128xf32>,
    %c0_i32_8 = arith.constant 0 : i32
    %11 = arith.cmpi eq, %arg2, %c0_i32_8 : i32
    %12 = arith.extui %11 : i1 to i32
    %c0_i32_9 = arith.constant 0 : i32
    %13 = arith.cmpi ne, %12, %c0_i32_9 : i32
    scf.if %13 {
      %c0_10 = arith.constant 0 : index
      %c0_11 = arith.constant 0 : index
      %14 = vector.load %arg8[%c0_10, %c0_11] : memref<32x128xf32, #tpu.memory_space<vmem>>, vector<32x128xf32>
      %c0_12 = arith.constant 0 : index
      %c0_13 = arith.constant 0 : index
      %15 = vector.load %arg5[%c0_12, %c0_13] : memref<1x128xf32, #tpu.memory_space<vmem>>, vector<1x128xf32>
      %16 = vector.broadcast %15 : vector<1x128xf32> to vector<32x128xf32>
      %17 = arith.addf %14, %16 : vector<32x128xf32>
      %c0_14 = arith.constant 0 : index
      %c0_15 = arith.constant 0 : index
      %18 = vector.load %arg6[%c0_14, %c0_15] : memref<32x128xf32, #tpu.memory_space<vmem>>, vector<32x128xf32>
      %19 = arith.addf %17, %18 : vector<32x128xf32>
      %c0_16 = arith.constant 0 : index
      %c0_17 = arith.constant 0 : index
      %20 = vector.load %arg7[%c0_16, %c0_17] : memref<32x128xf32, #tpu.memory_space<vmem>>, vector<32x128xf32>
      tpu.vector_store %arg7[%c0_16, %c0_17], %19 {strides = array<i32>} : memref<32x128xf32, #tpu.memory_space<vmem>>, vector<32x128xf32>,
    } else {
    }
    return
  }
  func.func @transform_0(%arg0: i32, %arg1: i32, %arg2: i32) -> (i32, i32) {
    %c0_i32 = arith.constant 0 : i32
    return %arg0, %arg2 : i32, i32
  }
  func.func @transform_1(%arg0: i32, %arg1: i32, %arg2: i32) -> (i32, i32) {
    %c0_i32 = arith.constant 0 : i32
    return %arg2, %arg1 : i32, i32
  }
  func.func @transform_2(%arg0: i32, %arg1: i32, %arg2: i32) -> (i32, i32) {
    %c0_i32 = arith.constant 0 : i32
    %c0_i32_0 = arith.constant 0 : i32
    return %c0_i32, %arg1 : i32, i32
  }
  func.func @transform_3(%arg0: i32, %arg1: i32, %arg2: i32) -> (i32, i32) {
    %c0_i32 = arith.constant 0 : i32
    return %arg0, %arg1 : i32, i32
  }
  func.func @transform_4(%arg0: i32, %arg1: i32, %arg2: i32) -> (i32, i32) {
    %c0_i32 = arith.constant 0 : i32
    return %arg0, %arg1 : i32, i32
  }
}

</mosaic_0001>

<llo_original>
// kernel: tpu_custom_call.1
$region0: #{tpu_custom_call.1}
  #allocation0 [shape = 'u32[]', space=smem, size = 0x4, offset = 0x4, fixed_abs, tag = 'smem constant byte address 0x4 - core index']
  #allocation1 [shape = 'u32[144,128]{1,0:T(1,128)}', space=vmem, size = 0x12000, scoped, tag = 'internal scratch']
  #allocation2 [shape = 'f32[32,128]{1,0:T(8,128)}', space=vmem, size = 0x4000, scoped, tag = 'scratch operand']
  %s0 = inlined_call_operand.hbm [shape: f32[32,128], index: 0, kind: input, shape index: {}]
  %s1 = inlined_call_operand.hbm [shape: f32[128,128], index: 1, kind: input, shape index: {}]
  %s2 = inlined_call_operand.vmem [shape: f32[1,128], index: 2, kind: input, shape index: {}]
  %s3 = inlined_call_operand.hbm [shape: f32[32,128], index: 3, kind: input, shape index: {}]
  %s4 = inlined_call_operand.hbm [shape: f32[32,128], index: 4, kind: output, shape index: {}]
  %s5 = sld [smem:[#allocation0]]
  $region46: #{tpu_custom_call.1} parent=0
    _
  %s7 = ssub.s32 1, %s5
  %s8 = scalar_select 0, %s7, %s5
  $region1: #{tpu_custom_call.1} parent=0
    #allocation3 [shape = 'u8[16384]{0}', space=vmem, size = 0x4000, scoped, tag = 'input window, operand 0, single buffered']
    #allocation4 [shape = 's32[1]{0}', space=sflag, size = 0x4, scoped, tag = 'scoped memory for tpu_custom_call.1']
    #allocation5 [shape = 's32[1]{0}', space=sflag, size = 0x4, scoped, tag = 'scoped memory for tpu_custom_call.1']
    #allocation6 [shape = 'u8[65536]{0}', space=vmem, size = 0x10000, scoped, tag = 'input window, operand 1, single buffered']
    #allocation7 [shape = 's32[1]{0}', space=sflag, size = 0x4, scoped, tag = 'scoped memory for tpu_custom_call.1']
    #allocation8 [shape = 'u8[16384]{0}', space=vmem, size = 0x4000, scoped, tag = 'input window, operand 3, single buffered']
    #allocation9 [shape = 'u8[16384]{0}', space=vmem, size = 0x4000, scoped, tag = 'output window, operand 0, single buffered']
    %9 = vsyncpa [#allocation4], 0
    %10 = vsyncpa [#allocation7], 0
    %11 = vsyncpa [#allocation5], 0
    // Predicated region
    $region2: #{tpu_custom_call.1} parent=1 // pred_check
      _
    $region3: #{tpu_custom_call.1} parent=1 // pred_check_branch
      %13 = sbr.rel (0) target = $region5
    $region4: #{tpu_custom_call.1} parent=1 // pred_region
      %s15 = ssub.s32 512, 512
      %16 = vsyncadd [#allocation4], %s15
      %s17 = sshll.u32 [#allocation3], 4
      %s18 = int_to_ptr.vmem [resolvable:$true] %s17
      %23 = dma.hbm_to_vmem [thread:$0]  %s0, 512, %s18, [#allocation4], 128, 128, 8
    $region5: #{tpu_custom_call.1} parent=1 // pred_fallthru
      _
    // Predicated region
    $region6: #{tpu_custom_call.1} parent=1 // pred_check
      _
    $region7: #{tpu_custom_call.1} parent=1 // pred_check_branch
      %25 = sbr.rel (0) target = $region9
    $region8: #{tpu_custom_call.1} parent=1 // pred_region
      %s27 = ssub.s32 2048, 2048
      %28 = vsyncadd [#allocation7], %s27
      %s29 = sshll.u32 [#allocation6], 4
      %s30 = int_to_ptr.vmem [resolvable:$true] %s29
      %35 = dma.hbm_to_vmem [thread:$0]  %s1, 2048, %s30, [#allocation7], 128, 128, 8
    $region9: #{tpu_custom_call.1} parent=1 // pred_fallthru
      _
    // Predicated region
    $region10: #{tpu_custom_call.1} parent=1 // pred_check
      _
    $region11: #{tpu_custom_call.1} parent=1 // pred_check_branch
      %37 = sbr.rel (0) target = $region13
    $region12: #{tpu_custom_call.1} parent=1 // pred_region
      _
    $region13: #{tpu_custom_call.1} parent=1 // pred_fallthru
      _
    // Predicated region
    $region14: #{tpu_custom_call.1} parent=1 // pred_check
      _
    $region15: #{tpu_custom_call.1} parent=1 // pred_check_branch
      %39 = sbr.rel (0) target = $region17
    $region16: #{tpu_custom_call.1} parent=1 // pred_region
      %s41 = ssub.s32 512, 512
      %42 = vsyncadd [#allocation7], %s41
      %s43 = sshll.u32 [#allocation8], 4
      %s44 = int_to_ptr.vmem [resolvable:$true] %s43
      %49 = dma.hbm_to_vmem [thread:$0]  %s3, 512, %s44, [#allocation7], 128, 128, 8
    $region17: #{tpu_custom_call.1} parent=1 // pred_fallthru
      _
    // Predicated region
    $region18: #{tpu_custom_call.1} parent=1 // pred_check
      _
    $region19: #{tpu_custom_call.1} parent=1 // pred_check_branch
      %51 = sbr.rel (0) target = $region21
    $region20: #{tpu_custom_call.1} parent=1 // pred_region
      %52 = dma.done [#allocation4], 512
    $region21: #{tpu_custom_call.1} parent=1 // pred_fallthru
      _
    // Predicated region
    $region22: #{tpu_custom_call.1} parent=1 // pred_check
      _
    $region23: #{tpu_custom_call.1} parent=1 // pred_check_branch
      %54 = sbr.rel (0) target = $region25
    $region24: #{tpu_custom_call.1} parent=1 // pred_region
      %55 = dma.done [#allocation7], 2048
    $region25: #{tpu_custom_call.1} parent=1 // pred_fallthru
      _
    // Predicated region
    $region26: #{tpu_custom_call.1} parent=1 // pred_check
      _
    $region27: #{tpu_custom_call.1} parent=1 // pred_check_branch
      %57 = sbr.rel (0) target = $region29
    $region28: #{tpu_custom_call.1} parent=1 // pred_region
      %58 = dma.done [#allocation7], 512
    $region29: #{tpu_custom_call.1} parent=1 // pred_fallthru
      _
    %p60 = scmp.eq.s32.totalorder 0, 0
    // Predicated region
    $region30: #{tpu_custom_call.1} parent=1 // pred_check
      %p61 = pneg %p60
    $region31: #{tpu_custom_call.1} parent=1 // pred_check_branch
      %63 = sbr.rel (%p61) target = $region33
    $region32: #{tpu_custom_call.1} parent=1 // pred_region
      %64 = vst [vmem:[#allocation2] sm:$0xff] 0.0
      %65 = vst [vmem:[#allocation2 + $0x8] sm:$0xff] 0.0
      %66 = vst [vmem:[#allocation2 + $0x10] sm:$0xff] 0.0
      %67 = vst [vmem:[#allocation2 + $0x18] sm:$0xff] 0.0
    $region33: #{tpu_custom_call.1} parent=1 // pred_fallthru
      _
    %v68 = vld [vmem:[#allocation2] sm:$0xff]
    %v69 = vld [vmem:[#allocation2 + $0x8] sm:$0xff]
    %v70 = vld [vmem:[#allocation2 + $0x10] sm:$0xff]
    %v71 = vld [vmem:[#allocation2 + $0x18] sm:$0xff]
    %v72 = vld [vmem:[#allocation3] sm:$0xff]
    %v73 = vld [vmem:[#allocation3 + $0x8] sm:$0xff]
    %v74 = vld [vmem:[#allocation3 + $0x10] sm:$0xff]
    %v75 = vld [vmem:[#allocation3 + $0x18] sm:$0xff]
    %v76 = vpack.c.bf16 %v73, %v72
    %v77 = vpack.c.bf16 %v75, %v74
    %v78 = vld [vmem:[#allocation6] sm:$0xff]
    %v79 = vld [vmem:[#allocation6 + $0x8] sm:$0xff]
    %v80 = vld [vmem:[#allocation6 + $0x10] sm:$0xff]
    %v81 = vld [vmem:[#allocation6 + $0x18] sm:$0xff]
    %v82 = vld [vmem:[#allocation6 + $0x20] sm:$0xff]
    %v83 = vld [vmem:[#allocation6 + $0x28] sm:$0xff]
    %v84 = vld [vmem:[#allocation6 + $0x30] sm:$0xff]
    %v85 = vld [vmem:[#allocation6 + $0x38] sm:$0xff]
    %v86 = vld [vmem:[#allocation6 + $0x40] sm:$0xff]
    %v87 = vld [vmem:[#allocation6 + $0x48] sm:$0xff]
    %v88 = vld [vmem:[#allocation6 + $0x50] sm:$0xff]
    %v89 = vld [vmem:[#allocation6 + $0x58] sm:$0xff]
    %v90 = vld [vmem:[#allocation6 + $0x60] sm:$0xff]
    %v91 = vld [vmem:[#allocation6 + $0x68] sm:$0xff]
    %v92 = vld [vmem:[#allocation6 + $0x70] sm:$0xff]
    %v93 = vld [vmem:[#allocation6 + $0x78] sm:$0xff]
    %v94 = vpack.c.bf16 %v79, %v78
    %v95 = vpack.c.bf16 %v81, %v80
    %v96 = vpack.c.bf16 %v83, %v82
    %v97 = vpack.c.bf16 %v85, %v84
    %v98 = vpack.c.bf16 %v87, %v86
    %v99 = vpack.c.bf16 %v89, %v88
    %v100 = vpack.c.bf16 %v91, %v90
    %v101 = vpack.c.bf16 %v93, %v92
    %102 = vmatprep.subr.bf16.mxu0 0
    %103 = vmatpush1.bf16.msra.mxu0 %v94
    %104 = vmatprep.subr.bf16.mxu0 0
    %105 = vmatpush1.bf16.msra.mxu0 %v95
    %106 = vmatprep.subr.bf16.mxu0 0
    %107 = vmatpush1.bf16.msra.mxu0 %v96
    %108 = vmatprep.subr.bf16.mxu0 0
    %109 = vmatpush1.bf16.msra.mxu0 %v97
    %110 = vmatprep.subr.bf16.mxu0 0
    %111 = vmatpush1.bf16.msra.mxu0 %v98
    %112 = vmatprep.subr.bf16.mxu0 0
    %113 = vmatpush1.bf16.msra.mxu0 %v99
    %114 = vmatprep.subr.bf16.mxu0 0
    %115 = vmatpush1.bf16.msra.mxu0 %v100
    %116 = vmatprep.subr.bf16.mxu0 0
    %117 = vmatpush1.bf16.msra.mxu0 %v101
    %118 = vmatprep.subr.bf16.mxu0 0
    %119 = vmatpush1.bf16.msra.mxu0 0
    %120 = vmatprep.subr.bf16.mxu0 0
    %121 = vmatpush1.bf16.msra.mxu0 0
    %122 = vmatprep.subr.bf16.mxu0 0
    %123 = vmatpush1.bf16.msra.mxu0 0
    %124 = vmatprep.subr.bf16.mxu0 0
    %125 = vmatpush1.bf16.msra.mxu0 0
    %126 = vmatprep.subr.bf16.mxu0 0
    %127 = vmatpush1.bf16.msra.mxu0 0
    %128 = vmatprep.subr.bf16.mxu0 0
    %129 = vmatpush1.bf16.msra.mxu0 0
    %130 = vmatprep.subr.bf16.mxu0 0
    %131 = vmatpush1.bf16.msra.mxu0 0
    %132 = vmatprep.subr.bf16.mxu0 0
    %133 = vmatpush1.bf16.msra.mxu0 0
    %134 = vmatprep.mubr.bf16.mxu0 0
    %135 = vmatmul.mubr.bf16.gmra.mrb[0].mxu0 %v76
    %v136 = vpop.f32.mrb[0].mxu0
    %v137 = vadd.f32 0.0, %v136
    %v138 = vpop.f32.mrb[0].mxu0
    %v139 = vpop.f32.mrb[0].mxu0
    %v140 = vadd.f32 0.0, %v139
    %v141 = vpop.f32.mrb[0].mxu0
    %142 = vmatprep.mubr.bf16.mxu0 0
    %143 = vmatmul.mubr.bf16.gmra.mrb[0].mxu0 %v77
    %v144 = vpop.f32.mrb[0].mxu0
    %v145 = vadd.f32 0.0, %v144
    %v146 = vpop.f32.mrb[0].mxu0
    %v147 = vpop.f32.mrb[0].mxu0
    %v148 = vadd.f32 0.0, %v147
    %v149 = vpop.f32.mrb[0].mxu0
    %150 = vdwg.mxu0
    %v151 = vadd.f32 %v68, %v137
    %v152 = vadd.f32 %v69, %v140
    %v153 = vadd.f32 %v70, %v145
    %v154 = vadd.f32 %v71, %v148
    %155 = vst [vmem:[#allocation2] sm:$0xff] %v151
    %156 = vst [vmem:[#allocation2 + $0x8] sm:$0xff] %v152
    %157 = vst [vmem:[#allocation2 + $0x10] sm:$0xff] %v153
    %158 = vst [vmem:[#allocation2 + $0x18] sm:$0xff] %v154
    // Predicated region
    $region34: #{tpu_custom_call.1} parent=1 // pred_check
      %p159 = pneg %p60
    $region35: #{tpu_custom_call.1} parent=1 // pred_check_branch
      %161 = sbr.rel (%p159) target = $region37
    $region36: #{tpu_custom_call.1} parent=1 // pred_region
      %v162 = vld [vmem:[#allocation2] sm:$0xff]
      %v163 = vld [vmem:[#allocation2 + $0x8] sm:$0xff]
      %v164 = vld [vmem:[#allocation2 + $0x10] sm:$0xff]
      %v165 = vld [vmem:[#allocation2 + $0x18] sm:$0xff]
      %v166 = vld [vmem:[%s2] sm:$0x1]
      %v168 = vlaneseq
      %v169 = vshrl.u32 %v168, 7
      %v170 = vsub.s32 0, %v169
      %v171 = vrot.slane %v166, %v170
      %v173 = vadd.f32 %v162, %v171
      %v174 = vadd.f32 %v163, %v171
      %v175 = vadd.f32 %v164, %v171
      %v176 = vadd.f32 %v165, %v171
      %v177 = vld [vmem:[#allocation8] sm:$0xff]
      %v178 = vld [vmem:[#allocation8 + $0x8] sm:$0xff]
      %v179 = vld [vmem:[#allocation8 + $0x10] sm:$0xff]
      %v180 = vld [vmem:[#allocation8 + $0x18] sm:$0xff]
      %v181 = vadd.f32 %v173, %v177
      %v182 = vadd.f32 %v174, %v178
      %v183 = vadd.f32 %v175, %v179
      %v184 = vadd.f32 %v176, %v180
      %185 = vst [vmem:[#allocation9] sm:$0xff] %v181
      %186 = vst [vmem:[#allocation9 + $0x8] sm:$0xff] %v182
      %187 = vst [vmem:[#allocation9 + $0x10] sm:$0xff] %v183
      %188 = vst [vmem:[#allocation9 + $0x18] sm:$0xff] %v184
    $region37: #{tpu_custom_call.1} parent=1 // pred_fallthru
      _
    // Predicated region
    $region38: #{tpu_custom_call.1} parent=1 // pred_check
      _
    $region39: #{tpu_custom_call.1} parent=1 // pred_check_branch
      %190 = sbr.rel (0) target = $region41
    $region40: #{tpu_custom_call.1} parent=1 // pred_region
      %s192 = ssub.s32 512, 512
      %193 = vsyncadd [#allocation5], %s192
      %s194 = sshll.u32 [#allocation9], 4
      %s195 = int_to_ptr.vmem [resolvable:$true] %s194
      %200 = dma.vmem_to_hbm [thread:$0]  %s195, 512, %s4, [#allocation5], 128, 128, 8
    $region41: #{tpu_custom_call.1} parent=1 // pred_fallthru
      _
    // Predicated region
    $region42: #{tpu_custom_call.1} parent=1 // pred_check
      _
    $region43: #{tpu_custom_call.1} parent=1 // pred_check_branch
      %202 = sbr.rel (0) target = $region45
    $region44: #{tpu_custom_call.1} parent=1 // pred_region
      %203 = dma.done [#allocation5], 512
    $region45: #{tpu_custom_call.1} parent=1 // pred_fallthru
      _
    %204 = vsyncpa [#allocation4], 1
    %205 = vsyncpa [#allocation7], 1
    %206 = vsyncpa [#allocation5], 1

</llo_original>
